<compile_context>
chip_gen: v7x
topology: tpu7x:2x2x1
jax: 0.10.0
libtpu: 0.0.40
codegen_flags: <defaults>
</compile_context>

<pallas_src>
import functools

import jax
import jax.numpy as jnp
from jax import lax
from jax.experimental import pallas as pl
from jax.experimental.pallas import tpu as pltpu

# Python float (NOT a jnp scalar) so it lowers as a literal instead of a captured constant.
_NEG_LARGE = -1e30  # large finite negative: exp underflows to 0; avoids -inf - -inf NaNs


def _ce_kernel(logits_ref, labels_ref, out_ref, m_ref, l_ref, t_ref, *,
               n_total, c_total, n_tiles, c_tiles):
    i = pl.program_id(0)            # batch-tile index  ("parallel")
    j = pl.program_id(1)            # class-tile index  ("arbitrary", reduction, last)
    tn, tc = logits_ref.shape

    # ---- init running stats at the start of each class sweep ----
    @pl.when(j == 0)
    def _():
        m_ref[...] = jnp.full(m_ref.shape, _NEG_LARGE, m_ref.dtype)
        l_ref[...] = jnp.zeros_like(l_ref)
        t_ref[...] = jnp.zeros_like(t_ref)

    # Loop-invariant local lane iota; label match compares it against (labels - j*tc),
    # so no per-element global column-id add is needed.
    local_col = lax.broadcasted_iota(jnp.int32, (tn, tc), 1)      # (tn, tc)
    rel_label = labels_ref[...] - j * tc                          # (tn, 1) int32

    def update(x):
        """Online-LSE + target-logit update for one class tile.

        `x` stays in the input dtype (bf16 selects are half the vregs on v6e/v7x);
        only the values feeding exp / the (tn,1) accumulators are upcast to f32.
        """
        # One-hot target-logit gather; exact even in bf16 (single nonzero lane per row).
        match = local_col == rel_label
        t_ref[...] += jnp.sum(jnp.where(match, x, 0.0), axis=-1,
                              keepdims=True).astype(jnp.float32)

        xf = x.astype(jnp.float32)
        tile_max = jnp.max(xf, axis=-1, keepdims=True)            # (tn, 1)
        m_prev = m_ref[...]
        m_new = jnp.maximum(m_prev, tile_max)
        p = jnp.exp(xf - m_new)
        l_ref[...] = jnp.exp(m_prev - m_new) * l_ref[...] + jnp.sum(
            p, axis=-1, keepdims=True)
        m_ref[...] = m_new

    # ---- class-tile body: validity mask only where it can actually matter ----
    c_rem = c_total - (c_tiles - 1) * tc     # valid lanes in the last class tile (static)
    if c_rem == tc:
        # No padded lanes anywhere: single fast path, no masking on any tile.
        update(logits_ref[...])
    else:
        @pl.when(j < c_tiles - 1)
        def _():
            update(logits_ref[...])          # interior tiles: no mask at all

        @pl.when(j == c_tiles - 1)
        def _():
            lane_ok = local_col < c_rem      # static mask; edge class tile only
            update(jnp.where(lane_ok, logits_ref[...], _NEG_LARGE))

    # ---- finalize: per-example loss for this batch tile ----
    @pl.when(j == c_tiles - 1)
    def _():
        loss = m_ref[...] + jnp.log(l_ref[...]) - t_ref[...]      # (tn, 1)
        n_rem = n_total - (n_tiles - 1) * tn
        if n_rem == tn:
            out_ref[...] = loss
        else:
            # Zero padded rows (garbage in padded rows stays row-local); runs once per
            # N tile so the extra iota/compare/select is negligible.
            row_ids = i * tn + lax.broadcasted_iota(jnp.int32, (tn, 1), 0)
            out_ref[...] = jnp.where(row_ids < n_total, loss, 0.0)


def _round_up(x, m):
    return ((x + m - 1) // m) * m


def cross_entropy_forward(index, output, label, *, tn_max=128, tc_max=8192):
    """Pallas equivalent of CrossEntropy.forward(index, output, label):
    F.cross_entropy(output, label) with mean reduction (no ignore_index / weights)."""
    del index  # unused, same as the PyTorch module
    n, c = output.shape
    labels2d = label.astype(jnp.int32).reshape(n, 1)

    # Class tile: full extent when small (always layout-legal), else a 128-aligned tile.
    tc = c if c <= tc_max else tc_max

    # Batch tile: 8-aligned. Prefer >= 2 N tiles when possible so the "parallel" axis
    # can shard across v7x's two TensorCores.
    if n > tn_max:
        tn = tn_max
    elif n > 8:
        tn = _round_up(pl.cdiv(n, 2), 8)
    else:
        tn = n

    n_tiles = pl.cdiv(n, tn)
    c_tiles = pl.cdiv(c, tc)

    # VMEM budget tracks the actual footprint (double-buffered logits block + slack);
    # stays well inside v7x's 64 MiB per-TC VMEM instead of requesting all of it.
    block_bytes = tn * tc * jnp.dtype(output.dtype).itemsize
    vmem_limit = int(min(48 * 1024 * 1024, max(8 * 1024 * 1024, 4 * block_bytes)))

    kernel = functools.partial(_ce_kernel, n_total=n, c_total=c,
                               n_tiles=n_tiles, c_tiles=c_tiles)

    per_example = pl.pallas_call(
        kernel,
        out_shape=jax.ShapeDtypeStruct((n_tiles * tn, 1), jnp.float32),
        grid_spec=pltpu.PrefetchScalarGridSpec(
            num_scalar_prefetch=0,
            grid=(n_tiles, c_tiles),
            in_specs=[
                pl.BlockSpec((tn, tc), lambda i, j: (i, j)),   # logits tile (input dtype)
                pl.BlockSpec((tn, 1), lambda i, j: (i, 0)),    # labels column for this N tile
            ],
            out_specs=pl.BlockSpec((tn, 1), lambda i, j: (i, 0)),
            scratch_shapes=[
                pltpu.VMEM((tn, 1), jnp.float32),   # running max
                pltpu.VMEM((tn, 1), jnp.float32),   # running sum-exp
                pltpu.VMEM((tn, 1), jnp.float32),   # accumulated target logit
            ],
        ),
        compiler_params=pltpu.CompilerParams(
            dimension_semantics=("parallel", "arbitrary"),
            vmem_limit_bytes=vmem_limit,
        ),
    )(output, labels2d)

    # Padded rows were zeroed in-kernel; mean over the true batch size (tiny, in XLA).
    # TODO(synk): fusing with the logits-producing matmul (never materializing logits in
    # HBM) is the next-level win but is out of scope for a standalone CrossEntropy module.
    return jnp.sum(per_example) / jnp.float32(n)


if __name__ == "__main__":
    # Shapes consistent with the module defaults: num_examp=8, num_classes=10.
    num_examp = 8
    num_classes = 10

    key = jax.random.PRNGKey(0)
    k1, k2, k3, k4, k5, k6 = jax.random.split(key, 6)

    logits = jax.random.normal(k1, (num_examp, num_classes), dtype=jnp.float32)
    labels = jax.random.randint(k2, (num_examp,), 0, num_classes, dtype=jnp.int32)
    index = jnp.arange(num_examp, dtype=jnp.int32)  # unused by forward, mirrors PyTorch API

    loss = jax.block_until_ready(cross_entropy_forward(index, logits, labels))
    ref = -jnp.mean(jax.nn.log_softmax(logits, axis=-1)[jnp.arange(num_examp), labels])
    assert jnp.allclose(loss, ref, atol=1e-5, rtol=1e-5), (loss, ref)

    # Multi-tile N and C with edge padding: exercises the masked edge class tile and
    # padded-row zeroing of the tiled online-LSE path.
    n2, c2 = 20, 300
    logits2 = jax.random.normal(k3, (n2, c2), dtype=jnp.float32)
    labels2 = jax.random.randint(k4, (n2,), 0, c2, dtype=jnp.int32)
    loss2 = jax.block_until_ready(
        cross_entropy_forward(jnp.arange(n2, dtype=jnp.int32), logits2, labels2,
                              tn_max=8, tc_max=128))
    ref2 = -jnp.mean(jax.nn.log_softmax(logits2, axis=-1)[jnp.arange(n2), labels2])
    assert jnp.allclose(loss2, ref2, atol=1e-4, rtol=1e-5), (loss2, ref2)

    # Default tiling path with bf16 logits: >=2 N tiles (megacore split), full-extent
    # class tile (no lane mask), bf16-domain one-hot select with f32 exp/accumulate.
    n3, c3 = 20, 300
    logits3 = jax.random.normal(k5, (n3, c3), dtype=jnp.float32).astype(jnp.bfloat16)
    labels3 = jax.random.randint(k6, (n3,), 0, c3, dtype=jnp.int32)
    loss3 = jax.block_until_ready(
        cross_entropy_forward(jnp.arange(n3, dtype=jnp.int32), logits3, labels3))
    ref3 = -jnp.mean(jax.nn.log_softmax(logits3.astype(jnp.float32), axis=-1)
                     [jnp.arange(n3), labels3])
    assert jnp.allclose(loss3, ref3, atol=2e-3, rtol=1e-3), (loss3, ref3)

    print("KERNEL_OK")
</pallas_src>

<mosaic_0001>
module attributes {stable_mosaic.version = 11 : i64} {
  func.func @_ce_kernel(%arg0: i32, %arg1: i32, %arg2: memref<8x10xf32, #tpu.memory_space<vmem>>, %arg3: memref<8x1xi32, #tpu.memory_space<vmem>>, %arg4: memref<8x1xf32, #tpu.memory_space<vmem>>, %arg5: memref<8x1xf32, #tpu.memory_space<vmem>>, %arg6: memref<8x1xf32, #tpu.memory_space<vmem>>, %arg7: memref<8x1xf32, #tpu.memory_space<vmem>>) attributes {dimension_semantics = [#tpu.dimension_semantics<parallel>, #tpu.dimension_semantics<arbitrary>], iteration_bounds = array<i64: 1, 1>, scalar_prefetch = 0 : i64, scratch_operands = 3 : i64, tpu.core_type = #tpu.core_type<tc>, window_params = [{transform_indices = @transform_0, window_bounds = array<i64: 8, 10>}, {transform_indices = @transform_1, window_bounds = array<i64: 8, 1>}, {transform_indices = @transform_2, window_bounds = array<i64: 8, 1>}]} {
    %c0_i32 = arith.constant 0 : i32
    %0 = arith.cmpi eq, %arg1, %c0_i32 : i32
    %1 = arith.extui %0 : i1 to i32
    %c0_i32_0 = arith.constant 0 : i32
    %2 = arith.cmpi ne, %1, %c0_i32_0 : i32
    scf.if %2 {
      %cst_21 = arith.constant -1.000000e+30 : f32
      %37 = vector.broadcast %cst_21 : f32 to vector<8x1xf32>
      %c0_22 = arith.constant 0 : index
      %c0_23 = arith.constant 0 : index
      %38 = vector.load %arg5[%c0_22, %c0_23] : memref<8x1xf32, #tpu.memory_space<vmem>>, vector<8x1xf32>
      tpu.vector_store %arg5[%c0_22, %c0_23], %37 {strides = array<i32>} : memref<8x1xf32, #tpu.memory_space<vmem>>, vector<8x1xf32>,
      %cst_24 = arith.constant 0.000000e+00 : f32
      %39 = vector.broadcast %cst_24 : f32 to vector<8x1xf32>
      %c0_25 = arith.constant 0 : index
      %c0_26 = arith.constant 0 : index
      %40 = vector.load %arg6[%c0_25, %c0_26] : memref<8x1xf32, #tpu.memory_space<vmem>>, vector<8x1xf32>
      tpu.vector_store %arg6[%c0_25, %c0_26], %39 {strides = array<i32>} : memref<8x1xf32, #tpu.memory_space<vmem>>, vector<8x1xf32>,
      %cst_27 = arith.constant 0.000000e+00 : f32
      %41 = vector.broadcast %cst_27 : f32 to vector<8x1xf32>
      %c0_28 = arith.constant 0 : index
      %c0_29 = arith.constant 0 : index
      %42 = vector.load %arg7[%c0_28, %c0_29] : memref<8x1xf32, #tpu.memory_space<vmem>>, vector<8x1xf32>
      tpu.vector_store %arg7[%c0_28, %c0_29], %41 {strides = array<i32>} : memref<8x1xf32, #tpu.memory_space<vmem>>, vector<8x1xf32>,
    } else {
    }
    %3 = tpu.iota {dimensions = array<i32: 1>} : vector<8x10xi32>
    %c0 = arith.constant 0 : index
    %c0_1 = arith.constant 0 : index
    %4 = vector.load %arg3[%c0, %c0_1] : memref<8x1xi32, #tpu.memory_space<vmem>>, vector<8x1xi32>
    %c10_i32 = arith.constant 10 : i32
    %5 = arith.muli %arg1, %c10_i32 : i32
    %6 = vector.broadcast %5 : i32 to vector<8x1xi32>
    %7 = arith.subi %4, %6 : vector<8x1xi32>
    %c0_2 = arith.constant 0 : index
    %c0_3 = arith.constant 0 : index
    %8 = vector.load %arg2[%c0_2, %c0_3] : memref<8x10xf32, #tpu.memory_space<vmem>>, vector<8x10xf32>
    %9 = vector.broadcast %7 : vector<8x1xi32> to vector<8x10xi32>
    %10 = arith.cmpi eq, %3, %9 : vector<8x10xi32>
    %c0_4 = arith.constant 0 : index
    %c0_5 = arith.constant 0 : index
    %11 = vector.load %arg7[%c0_4, %c0_5] : memref<8x1xf32, #tpu.memory_space<vmem>>, vector<8x1xf32>
    %cst = arith.constant 0.000000e+00 : f32
    %12 = vector.broadcast %cst : f32 to vector<8x10xf32>
    %13 = arith.select %10, %8, %12 : vector<8x10xi1>, vector<8x10xf32>
    %cst_6 = arith.constant dense<0.000000e+00> : vector<8xf32>
    %14 = vector.multi_reduction <add>, %13, %cst_6 [1] : vector<8x10xf32> to vector<8xf32>
    %15 = vector.shape_cast %14 : vector<8xf32> to vector<8x1xf32>
    %16 = arith.addf %11, %15 : vector<8x1xf32>
    %c0_7 = arith.constant 0 : index
    %c0_8 = arith.constant 0 : index
    %17 = vector.load %arg7[%c0_7, %c0_8] : memref<8x1xf32, #tpu.memory_space<vmem>>, vector<8x1xf32>
    tpu.vector_store %arg7[%c0_7, %c0_8], %16 {strides = array<i32>} : memref<8x1xf32, #tpu.memory_space<vmem>>, vector<8x1xf32>,
    %cst_9 = arith.constant dense<0xFF800000> : vector<8xf32>
    %18 = vector.multi_reduction <maximumf>, %8, %cst_9 [1] : vector<8x10xf32> to vector<8xf32>
    %19 = vector.shape_cast %18 : vector<8xf32> to vector<8x1xf32>
    %c0_10 = arith.constant 0 : index
    %c0_11 = arith.constant 0 : index
    %20 = vector.load %arg5[%c0_10, %c0_11] : memref<8x1xf32, #tpu.memory_space<vmem>>, vector<8x1xf32>
    %21 = arith.maximumf %20, %19 : vector<8x1xf32>
    %22 = vector.broadcast %21 : vector<8x1xf32> to vector<8x10xf32>
    %23 = arith.subf %8, %22 : vector<8x10xf32>
    %24 = math.exp %23 : vector<8x10xf32>
    %25 = arith.subf %20, %21 : vector<8x1xf32>
    %26 = math.exp %25 : vector<8x1xf32>
    %c0_12 = arith.constant 0 : index
    %c0_13 = arith.constant 0 : index
    %27 = vector.load %arg6[%c0_12, %c0_13] : memref<8x1xf32, #tpu.memory_space<vmem>>, vector<8x1xf32>
    %28 = arith.mulf %26, %27 : vector<8x1xf32>
    %cst_14 = arith.constant dense<0.000000e+00> : vector<8xf32>
    %29 = vector.multi_reduction <add>, %24, %cst_14 [1] : vector<8x10xf32> to vector<8xf32>
    %30 = vector.shape_cast %29 : vector<8xf32> to vector<8x1xf32>
    %31 = arith.addf %28, %30 : vector<8x1xf32>
    %c0_15 = arith.constant 0 : index
    %c0_16 = arith.constant 0 : index
    %32 = vector.load %arg6[%c0_15, %c0_16] : memref<8x1xf32, #tpu.memory_space<vmem>>, vector<8x1xf32>
    tpu.vector_store %arg6[%c0_15, %c0_16], %31 {strides = array<i32>} : memref<8x1xf32, #tpu.memory_space<vmem>>, vector<8x1xf32>,
    %c0_17 = arith.constant 0 : index
    %c0_18 = arith.constant 0 : index
    %33 = vector.load %arg5[%c0_17, %c0_18] : memref<8x1xf32, #tpu.memory_space<vmem>>, vector<8x1xf32>
    tpu.vector_store %arg5[%c0_17, %c0_18], %21 {strides = array<i32>} : memref<8x1xf32, #tpu.memory_space<vmem>>, vector<8x1xf32>,
    %c0_i32_19 = arith.constant 0 : i32
    %34 = arith.cmpi eq, %arg1, %c0_i32_19 : i32
    %35 = arith.extui %34 : i1 to i32
    %c0_i32_20 = arith.constant 0 : i32
    %36 = arith.cmpi ne, %35, %c0_i32_20 : i32
    scf.if %36 {
      %c0_21 = arith.constant 0 : index
      %c0_22 = arith.constant 0 : index
      %37 = vector.load %arg5[%c0_21, %c0_22] : memref<8x1xf32, #tpu.memory_space<vmem>>, vector<8x1xf32>
      %c0_23 = arith.constant 0 : index
      %c0_24 = arith.constant 0 : index
      %38 = vector.load %arg6[%c0_23, %c0_24] : memref<8x1xf32, #tpu.memory_space<vmem>>, vector<8x1xf32>
      %39 = math.log %38 : vector<8x1xf32>
      %40 = arith.addf %37, %39 : vector<8x1xf32>
      %c0_25 = arith.constant 0 : index
      %c0_26 = arith.constant 0 : index
      %41 = vector.load %arg7[%c0_25, %c0_26] : memref<8x1xf32, #tpu.memory_space<vmem>>, vector<8x1xf32>
      %42 = arith.subf %40, %41 : vector<8x1xf32>
      %c0_27 = arith.constant 0 : index
      %c0_28 = arith.constant 0 : index
      %43 = vector.load %arg4[%c0_27, %c0_28] : memref<8x1xf32, #tpu.memory_space<vmem>>, vector<8x1xf32>
      tpu.vector_store %arg4[%c0_27, %c0_28], %42 {strides = array<i32>} : memref<8x1xf32, #tpu.memory_space<vmem>>, vector<8x1xf32>,
    } else {
    }
    return
  }
  func.func @transform_0(%arg0: i32, %arg1: i32) -> (i32, i32) {
    %c0_i32 = arith.constant 0 : i32
    return %arg0, %arg1 : i32, i32
  }
  func.func @transform_1(%arg0: i32, %arg1: i32) -> (i32, i32) {
    %c0_i32 = arith.constant 0 : i32
    %c0_i32_0 = arith.constant 0 : i32
    return %arg0, %c0_i32 : i32, i32
  }
  func.func @transform_2(%arg0: i32, %arg1: i32) -> (i32, i32) {
    %c0_i32 = arith.constant 0 : i32
    %c0_i32_0 = arith.constant 0 : i32
    return %arg0, %c0_i32 : i32, i32
  }
}

</mosaic_0001>

<llo_original>
// kernel: tpu_custom_call.1
$region0: #{tpu_custom_call.1}
  #allocation0 [shape = 'u32[]', space=smem, size = 0x4, offset = 0x4, fixed_abs, tag = 'smem constant byte address 0x4 - core index']
  #allocation1 [shape = 'u32[144,128]{1,0:T(1,128)}', space=vmem, size = 0x12000, scoped, tag = 'internal scratch']
  #allocation2 [shape = 'f32[8,1]{1,0:T(8,128)}', space=vmem, size = 0x1000, scoped, tag = 'scratch operand']
  #allocation3 [shape = 'f32[8,1]{1,0:T(8,128)}', space=vmem, size = 0x1000, scoped, tag = 'scratch operand']
  #allocation4 [shape = 'f32[8,1]{1,0:T(8,128)}', space=vmem, size = 0x1000, scoped, tag = 'scratch operand']
  %s0 = inlined_call_operand.vmem [shape: f32[8,10], index: 0, kind: input, shape index: {}]
  %s1 = inlined_call_operand.vmem [shape: s32[8,1], index: 1, kind: input, shape index: {}]
  %s2 = inlined_call_operand.vmem [shape: f32[8,1], index: 2, kind: output, shape index: {}]
  %s3 = sld [smem:[#allocation0]]
  $region26: #{tpu_custom_call.1} parent=0
    _
  %s5 = ssub.s32 1, %s3
  %s6 = scalar_select 0, %s5, %s3
  // Predicated region
  $region2: #{tpu_custom_call.1} parent=0 // pred_check
    _
  $region3: #{tpu_custom_call.1} parent=0 // pred_check_branch
    %8 = sbr.rel (0) target = $region5
  $region4: #{tpu_custom_call.1} parent=0 // pred_region
    _
  $region5: #{tpu_custom_call.1} parent=0 // pred_fallthru
    _
  // Predicated region
  $region6: #{tpu_custom_call.1} parent=0 // pred_check
    _
  $region7: #{tpu_custom_call.1} parent=0 // pred_check_branch
    %10 = sbr.rel (0) target = $region9
  $region8: #{tpu_custom_call.1} parent=0 // pred_region
    _
  $region9: #{tpu_custom_call.1} parent=0 // pred_fallthru
    _
  %p11 = scmp.eq.s32.totalorder 0, 0
  // Predicated region
  $region10: #{tpu_custom_call.1} parent=0 // pred_check
    %p12 = pneg %p11
  $region11: #{tpu_custom_call.1} parent=0 // pred_check_branch
    %14 = sbr.rel (%p12) target = $region13
  $region12: #{tpu_custom_call.1} parent=0 // pred_region
    %vm15 = vcmask 7168
    %16 = vst.msk [vmem:[#allocation2] sm:$0xff] %vm15, -1e+30
    %17 = vst.msk [vmem:[#allocation3] sm:$0xff] %vm15, 0.0
    %18 = vst.msk [vmem:[#allocation4] sm:$0xff] %vm15, 0.0
  $region13: #{tpu_custom_call.1} parent=0 // pred_fallthru
    _
  %v19 = vlaneseq
  %v20 = vand.u32 %v19, 127
  %v21 = vld [vmem:[%s1] sm:$0xff]
  %s22 = smul.u32 0, 10
  %v23 = vstv %s22
  %v24 = vsub.s32 %v21, %v23
  %v25 = vld [vmem:[%s0] sm:$0xff]
  %26 = vset.pattern.permute.xlu0 0
  %27 = vperm.xlu0 %26, %v24
  %v28 = vpop.permute.xlu0 %27
  %vm29 = vcmp.eq.s32.totalorder %v20, %v28
  %v30 = vld [vmem:[#allocation4] sm:$0xff]
  %v31 = vsel %vm29, %v25, 0.0
  %vm32 = vcmask 80896
  %v33 = vsel %vm32, %v31, 0.0
  %34 = vadd.xlane.f32.xlu0 %v33
  %v35 = vpop.xlane.xlu0 %34
  %v36 = vadd.f32 %v30, %v35
  %vm37 = vcmask 7168
  %38 = vst.msk [vmem:[#allocation4] sm:$0xff] %vm37, %v36
  %v39 = vsel %vm32, %v25, -inf
  %40 = vmax.xlane.f32.xlu0 %v39
  %v41 = vpop.xlane.xlu0 %40
  %v42 = vld [vmem:[#allocation2] sm:$0xff]
  %v43 = vmax.f32 %v42, %v41
  %45 = vset.pattern.permute.xlu0 0
  %46 = vperm.xlu0 %45, %v43
  %v47 = vpop.permute.xlu0 %46
  %v49 = vsub.f32 %v25, %v47
  %v50 = vmul.f32 %v49, 1.442695
  %v51 = vpow.pop %v50
  %v52 = vsub.f32 %v42, %v43
  %v53 = vmul.f32 %v52, 1.442695
  %v54 = vpow.pop %v53
  %v55 = vld [vmem:[#allocation3] sm:$0xff]
  %v56 = vmul.f32 %v54, %v55
  %v57 = vsel %vm32, %v51, 0.0
  %58 = vadd.xlane.f32.xlu0 %v57
  %v59 = vpop.xlane.xlu0 %58
  %v60 = vadd.f32 %v56, %v59
  %61 = vst.msk [vmem:[#allocation3] sm:$0xff] %vm37, %v60
  %62 = vst.msk [vmem:[#allocation2] sm:$0xff] %vm37, %v43
  // Predicated region
  $region14: #{tpu_custom_call.1} parent=0 // pred_check
    %p63 = pneg %p11
  $region15: #{tpu_custom_call.1} parent=0 // pred_check_branch
    %65 = sbr.rel (%p63) target = $region17
  $region16: #{tpu_custom_call.1} parent=0 // pred_region
    %v66 = vld [vmem:[#allocation2] sm:$0xff]
    %v67 = vld [vmem:[#allocation3] sm:$0xff]
    %v68 = vlog2.pop %v67
    %v69 = vmul.f32 %v68, 0.6931472
    %v70 = vadd.f32 %v66, %v69
    %v71 = vld [vmem:[#allocation4] sm:$0xff]
    %v72 = vsub.f32 %v70, %v71
    %73 = vst.msk [vmem:[%s2] sm:$0xff] %vm37, %v72
  $region17: #{tpu_custom_call.1} parent=0 // pred_fallthru
    _
  // Predicated region
  $region18: #{tpu_custom_call.1} parent=0 // pred_check
    _
  $region19: #{tpu_custom_call.1} parent=0 // pred_check_branch
    %75 = sbr.rel (0) target = $region21
  $region20: #{tpu_custom_call.1} parent=0 // pred_region
    _
  $region21: #{tpu_custom_call.1} parent=0 // pred_fallthru
    _
  // Predicated region
  $region22: #{tpu_custom_call.1} parent=0 // pred_check
    _
  $region23: #{tpu_custom_call.1} parent=0 // pred_check_branch
    %77 = sbr.rel (0) target = $region25
  $region24: #{tpu_custom_call.1} parent=0 // pred_region
    _
  $region25: #{tpu_custom_call.1} parent=0 // pred_fallthru
    _

</llo_original>
